<compile_context>
chip_gen: v7x
topology: tpu7x:2x2x1
jax: 0.10.0
libtpu: 0.0.40
codegen_flags: <defaults>
</compile_context>

<pallas_src>
import functools

import jax
import jax.numpy as jnp
from jax.experimental import pallas as pl
from jax.experimental.pallas import tpu as pltpu


def _round_up(a, b):
    return (a + b - 1) // b * b


def _vmem_capacity_bytes():
    """Physical VMEM per core (generation-aware); conservative 128 MiB fallback."""
    try:
        return int(pltpu.get_tpu_info().vmem_capacity_bytes)
    except Exception:
        return 128 * 2 ** 20  # v5e / v6e; v7x-capable JAX versions expose get_tpu_info()


def _layer_norm_f32(x_f32, gamma_f32, beta_f32, eps):
    """Annotated-Transformer LayerNorm: unbiased (N-1) std, eps added to the std (not in sqrt).

    Intentionally matches the reference module's custom LayerNorm, NOT torch.nn.LayerNorm
    (which uses biased variance and puts eps inside the sqrt).
    """
    d = x_f32.shape[-1]
    mean = jnp.mean(x_f32, axis=-1, keepdims=True)
    diff = x_f32 - mean
    var_unbiased = jnp.sum(diff * diff, axis=-1, keepdims=True) * (1.0 / (d - 1))
    std = jnp.sqrt(var_unbiased)
    inv = 1.0 / (std + eps)  # exact reciprocal: LN runs once per row tile, cost is noise
    return gamma_f32 * (diff * inv) + beta_f32


# ----------------------------------------------------------------------------------------------
# Path A (primary): W fully VMEM-resident, 1-D grid over row tiles.
# ----------------------------------------------------------------------------------------------
def _resident_kernel(seed_ref, x_ref, gamma_ref, beta_ref, w_ref, b_ref, o_ref,
                     *, eps, dropout_rate, keep_threshold_u32):
    x = x_ref[...].astype(jnp.float32)                                   # (rt, D)
    normed = _layer_norm_f32(x,
                             gamma_ref[...].astype(jnp.float32),
                             beta_ref[...].astype(jnp.float32), eps)

    # sublayer = Linear(D, D); W's block index is constant across the grid, so it is DMA'd from
    # HBM once and stays VMEM-resident -> the kernel is MXU-bound instead of W-restream-bound.
    y = jnp.dot(normed.astype(w_ref.dtype), w_ref[...],
                preferred_element_type=jnp.float32)
    y = y + b_ref[...].astype(jnp.float32)

    if dropout_rate > 0.0:
        # Training-mode inverted dropout on the TPU hardware PRNG (stream differs from torch).
        pltpu.prng_seed(seed_ref[0] + pl.program_id(0))
        bits = pltpu.bitcast(pltpu.prng_random_bits(y.shape), jnp.uint32)
        keep = bits >= jnp.uint32(keep_threshold_u32)                    # integer threshold
        y = jnp.where(keep, y * jnp.float32(1.0 / (1.0 - dropout_rate)), jnp.float32(0.0))

    # Residual read straight from the same x tile (single HBM read of x).
    o_ref[...] = (x + y).astype(o_ref.dtype)


# ----------------------------------------------------------------------------------------------
# Path B (fallback, very large D): column-streaming of W; rows outer, W-columns inner.
# ----------------------------------------------------------------------------------------------
def _streaming_kernel(seed_ref, x_ref, gamma_ref, beta_ref, w_ref, b_ref, o_ref, normed_ref,
                      *, eps, dropout_rate, keep_threshold_u32, col_tile):
    j = pl.program_id(1)

    # LayerNorm once per row tile, cached in the VMEM scratch and reused by every column tile.
    # INVARIANT: axis 1 (columns) must remain the inner, sequentially executed ("arbitrary")
    # grid axis on a single core; do not reorder the grid axes or mark axis 1 "parallel".
    @pl.when(j == 0)
    def _():
        x = x_ref[...].astype(jnp.float32)
        normed = _layer_norm_f32(x,
                                 gamma_ref[...].astype(jnp.float32),
                                 beta_ref[...].astype(jnp.float32), eps)
        normed_ref[...] = normed.astype(normed_ref.dtype)
        if dropout_rate > 0.0:
            # Seed once per row tile; later column tiles consume the advancing stateful stream.
            pltpu.prng_seed(seed_ref[0] + pl.program_id(0))

    # sublayer column tile on the MXU (matmul dtype in, f32 accumulate).
    y = jnp.dot(normed_ref[...], w_ref[...], preferred_element_type=jnp.float32)
    y = y + b_ref[...].astype(jnp.float32)

    if dropout_rate > 0.0:
        bits = pltpu.bitcast(pltpu.prng_random_bits(y.shape), jnp.uint32)
        keep = bits >= jnp.uint32(keep_threshold_u32)
        y = jnp.where(keep, y * jnp.float32(1.0 / (1.0 - dropout_rate)), jnp.float32(0.0))

    # Residual: slice this column tile out of the already-VMEM-resident full-row x view
    # (no second HBM read of x).  col_tile is a multiple of 128 whenever j can be > 0, so the
    # lane slice is 128-aligned.
    col0 = pl.multiple_of(j * col_tile, 128)
    x_cols = x_ref[:, pl.ds(col0, col_tile)].astype(jnp.float32)
    o_ref[...] = (x_cols + y).astype(o_ref.dtype)


# ----------------------------------------------------------------------------------------------
# Wrapper
# ----------------------------------------------------------------------------------------------
def sublayer_connection(x, gamma, beta, w, b, *, eps=1e-6, dropout_rate=0.0, seed=0,
                        row_tile=None, col_tile=512, matmul_dtype=jnp.bfloat16,
                        force_streaming=False):
    """out = x + dropout(Linear(LayerNorm(x))),  x: (B, S, D).

    Pass `w` already cast to `matmul_dtype` (e.g. bf16) so the cast does not become a full extra
    HBM read+write of W on every call (the cast here is a fallback for convenience).
    """
    B, S, D = x.shape
    assert D > 1, "unbiased std (N-1 divisor) is degenerate for D == 1"
    n_rows = B * S
    x_bytes = jnp.dtype(x.dtype).itemsize
    mx_bytes = jnp.dtype(matmul_dtype).itemsize

    w_mx = w if w.dtype == jnp.dtype(matmul_dtype) else w.astype(matmul_dtype)
    # TODO(synk): on v7x an fp8 W operand (f32 accumulation) would halve W traffic for very large
    # D, but needs an accuracy sign-off; not enabled here.

    vmem_cap = _vmem_capacity_bytes()

    # Row tile: multiple of 8 sublanes, clamped to the (padded) row count.
    rt_base = 256 if row_tile is None else row_tile
    rt = max(8, min(_round_up(rt_base, 8), _round_up(n_rows, 8)))

    # Decide: W fully VMEM-resident (1-D grid) vs. column streaming (2-D grid).
    resident_bytes = (D * D * mx_bytes            # W, single resident copy (constant block index)
                      + 2 * rt * D * x_bytes      # x row tiles, double-buffered
                      + 2 * rt * D * x_bytes      # output row tiles, double-buffered
                      + 6 * D * 4)                # gamma / beta / bias
    use_resident = (not force_streaming) and resident_bytes <= int(0.8 * vmem_cap)

    if (not use_resident) and (row_tile is None) and vmem_cap >= 100 * 2 ** 20:
        # Column-streaming on 128-MiB parts (v5e/v6e): a larger row tile doubles the FLOPs per
        # re-streamed W byte.  Keep rt=256 on v7x (64 MiB) where rt=512 tiles do not fit.
        rt = max(8, min(512, _round_up(n_rows, 8)))

    padded_rows = _round_up(n_rows, rt)
    x2 = x.reshape(n_rows, D)
    if padded_rows != n_rows:
        x2 = jnp.pad(x2, ((0, padded_rows - n_rows), (0, 0)))

    gamma2 = gamma.reshape(1, D)
    beta2 = beta.reshape(1, D)
    b2 = b.reshape(1, D)
    seed_arr = jnp.asarray([seed], dtype=jnp.int32)

    # keep iff uniform_u32 >= rate * 2^32   (inverted dropout)
    keep_threshold_u32 = min(int(float(dropout_rate) * 4294967296.0), 4294967295)

    n_row_tiles = padded_rows // rt

    if use_resident:
        kernel = functools.partial(_resident_kernel,
                                   eps=float(eps),
                                   dropout_rate=float(dropout_rate),
                                   keep_threshold_u32=keep_threshold_u32)
        grid_spec = pltpu.PrefetchScalarGridSpec(
            num_scalar_prefetch=0,
            grid=(n_row_tiles,),
            in_specs=[
                pl.BlockSpec(memory_space=pltpu.SMEM),            # dropout seed (scalar)
                pl.BlockSpec((rt, D), lambda i: (i, 0)),          # x row tile
                pl.BlockSpec((1, D), lambda i: (0, 0)),           # gamma
                pl.BlockSpec((1, D), lambda i: (0, 0)),           # beta
                pl.BlockSpec((D, D), lambda i: (0, 0)),           # W (resident: constant index)
                pl.BlockSpec((1, D), lambda i: (0, 0)),           # bias
            ],
            out_specs=pl.BlockSpec((rt, D), lambda i: (i, 0)),
        )
        dim_sem = ("parallel",)                                   # row tiles shard across TCs
        w_hbm_bytes = D * D * mx_bytes                            # W streamed exactly once
        vmem_est = resident_bytes
    else:
        # Column tile over W's output dim: largest multiple of 128 that divides D.
        ct = D
        for cand in (col_tile, 512, 384, 256, 128):
            if cand % 128 == 0 and cand <= D and D % cand == 0:
                ct = cand
                break
        n_col_tiles = D // ct
        kernel = functools.partial(_streaming_kernel,
                                   eps=float(eps),
                                   dropout_rate=float(dropout_rate),
                                   keep_threshold_u32=keep_threshold_u32,
                                   col_tile=ct)
        grid_spec = pltpu.PrefetchScalarGridSpec(
            num_scalar_prefetch=0,
            grid=(n_row_tiles, n_col_tiles),                      # rows outer, W columns inner
            in_specs=[
                pl.BlockSpec(memory_space=pltpu.SMEM),            # dropout seed (scalar)
                pl.BlockSpec((rt, D), lambda i, j: (i, 0)),       # x row tile (LN + residual)
                pl.BlockSpec((1, D), lambda i, j: (0, 0)),        # gamma
                pl.BlockSpec((1, D), lambda i, j: (0, 0)),        # beta
                pl.BlockSpec((D, ct), lambda i, j: (0, j)),       # W column tile
                pl.BlockSpec((1, ct), lambda i, j: (0, j)),       # bias column tile
            ],
            out_specs=pl.BlockSpec((rt, ct), lambda i, j: (i, j)),
            scratch_shapes=[pltpu.VMEM((rt, D), matmul_dtype)],   # cached norm(x) per row tile
        )
        dim_sem = ("parallel", "arbitrary")
        w_hbm_bytes = D * D * mx_bytes * n_row_tiles              # W re-streamed per row tile
        vmem_est = (2 * rt * D * x_bytes + 2 * D * ct * mx_bytes + 2 * rt * ct * x_bytes
                    + rt * D * mx_bytes + 6 * D * 4)

    # Generation-aware VMEM request: sized from the actual footprint, capped below physical.
    vmem_limit = int(min(0.9 * vmem_cap,
                         max(32 * 2 ** 20, int(1.5 * vmem_est) + (4 << 20))))

    cost = pl.CostEstimate(
        flops=int(2 * padded_rows * D * D + 12 * padded_rows * D),
        transcendentals=int(padded_rows),
        bytes_accessed=int(2 * padded_rows * D * x_bytes + w_hbm_bytes + 3 * D * 4),
    )

    out2 = pl.pallas_call(
        kernel,
        out_shape=jax.ShapeDtypeStruct((padded_rows, D), x.dtype),
        grid_spec=grid_spec,
        compiler_params=pltpu.CompilerParams(
            dimension_semantics=dim_sem,
            vmem_limit_bytes=vmem_limit),
        cost_estimate=cost,
    )(seed_arr, x2, gamma2, beta2, w_mx, b2)

    return out2[:n_rows].reshape(B, S, D)


def _reference(x, gamma, beta, w, b, eps=1e-6):
    """Pure-JAX f32 reference (dropout_rate=0 -> identity dropout)."""
    mean = jnp.mean(x, axis=-1, keepdims=True)
    diff = x - mean
    var_unbiased = jnp.sum(diff * diff, axis=-1, keepdims=True) / (x.shape[-1] - 1)
    std = jnp.sqrt(var_unbiased)
    normed = gamma * diff / (std + eps) + beta
    y = normed @ w + b
    return x + y


if __name__ == "__main__":
    # Small shapes consistent with the module: batch=2, seq=8, hidden=32.
    B, S, D = 2, 8, 32
    key = jax.random.PRNGKey(0)
    kx, kw, kb, kg, kbe, kx2, kw2, kb2 = jax.random.split(key, 8)

    x = jax.random.normal(kx, (B, S, D), dtype=jnp.float32)
    gamma = jnp.ones((D,), dtype=jnp.float32)      # LayerNorm a_2 init
    beta = jnp.zeros((D,), dtype=jnp.float32)      # LayerNorm b_2 init
    w = jax.random.normal(kw, (D, D), dtype=jnp.float32) * (1.0 / jnp.sqrt(D))
    b = jax.random.normal(kb, (D,), dtype=jnp.float32) * 0.01

    ref = _reference(x, gamma, beta, w, b, eps=1e-6)

    # 1) W-resident path, f32 MXU operands: tight check of the LN / linear / residual math.
    out_f32 = jax.block_until_ready(
        sublayer_connection(x, gamma, beta, w, b, eps=1e-6, dropout_rate=0.0,
                            matmul_dtype=jnp.float32))
    assert out_f32.shape == (B, S, D)
    err = float(jnp.max(jnp.abs(out_f32 - ref)))
    assert jnp.allclose(out_f32, ref, atol=2e-2, rtol=2e-2), f"f32 resident mismatch ({err})"

    # 2) W-resident path, bf16 MXU feed (production config); W pre-cast ONCE outside the call so
    #    the per-call f32->bf16 cast is hoisted out of the hot path.
    w_bf16 = w.astype(jnp.bfloat16)
    out_bf16 = jax.block_until_ready(
        sublayer_connection(x, gamma, beta, w_bf16, b, eps=1e-6, dropout_rate=0.0,
                            matmul_dtype=jnp.bfloat16))
    err = float(jnp.max(jnp.abs(out_bf16 - ref)))
    assert jnp.allclose(out_bf16, ref, atol=6e-2, rtol=6e-2), f"bf16 resident mismatch ({err})"

    # 3) Forced column-streaming fallback (the very-large-D configuration), exercised here at
    #    D=256 with 2 row tiles x 2 column tiles so the cached-LN scratch reuse and the residual
    #    lane-slice are both covered.
    D2 = 256
    x2 = jax.random.normal(kx2, (B, S, D2), dtype=jnp.float32)
    gamma2 = 1.0 + 0.1 * jax.random.normal(kg, (D2,), dtype=jnp.float32)
    beta2 = 0.05 * jax.random.normal(kbe, (D2,), dtype=jnp.float32)
    w2 = jax.random.normal(kw2, (D2, D2), dtype=jnp.float32) * (1.0 / jnp.sqrt(D2))
    b2 = jax.random.normal(kb2, (D2,), dtype=jnp.float32) * 0.01
    ref2 = _reference(x2, gamma2, beta2, w2, b2, eps=1e-6)
    out_stream = jax.block_until_ready(
        sublayer_connection(x2, gamma2, beta2, w2, b2, eps=1e-6, dropout_rate=0.0,
                            matmul_dtype=jnp.float32, force_streaming=True,
                            row_tile=8, col_tile=128))
    assert out_stream.shape == (B, S, D2)
    err = float(jnp.max(jnp.abs(out_stream - ref2)))
    assert jnp.allclose(out_stream, ref2, atol=2e-2, rtol=2e-2), f"streaming mismatch ({err})"

    # NOTE: training-mode dropout (dropout_rate > 0) is implemented in-kernel on the TPU hardware
    # PRNG (pltpu.prng_seed / prng_random_bits, integer-threshold keep mask); its random stream
    # intentionally differs from torch's, so it is not asserted against the reference here.

    print("KERNEL_OK")
</pallas_src>

<mosaic_0001>
module attributes {stable_mosaic.version = 11 : i64} {
  func.func @_resident_kernel(%arg0: i32, %arg1: memref<1xi32, #tpu.memory_space<smem>>, %arg2: memref<16x32xf32, #tpu.memory_space<vmem>>, %arg3: memref<1x32xf32, #tpu.memory_space<vmem>>, %arg4: memref<1x32xf32, #tpu.memory_space<vmem>>, %arg5: memref<32x32xf32, #tpu.memory_space<vmem>>, %arg6: memref<1x32xf32, #tpu.memory_space<vmem>>, %arg7: memref<16x32xf32, #tpu.memory_space<vmem>>) attributes {dimension_semantics = [#tpu.dimension_semantics<parallel>], iteration_bounds = array<i64: 1>, scalar_prefetch = 0 : i64, scratch_operands = 0 : i64, tpu.core_type = #tpu.core_type<tc>, window_params = [{transform_indices = @transform_0, window_bounds = array<i64: 1>}, {transform_indices = @transform_1, window_bounds = array<i64: 16, 32>}, {pipeline_mode = #tpu.pipeline_mode<synchronous>, transform_indices = @transform_2, window_bounds = array<i64: 1, 32>}, {pipeline_mode = #tpu.pipeline_mode<synchronous>, transform_indices = @transform_3, window_bounds = array<i64: 1, 32>}, {pipeline_mode = #tpu.pipeline_mode<synchronous>, transform_indices = @transform_4, window_bounds = array<i64: 32, 32>}, {pipeline_mode = #tpu.pipeline_mode<synchronous>, transform_indices = @transform_5, window_bounds = array<i64: 1, 32>}, {transform_indices = @transform_6, window_bounds = array<i64: 16, 32>}]} {
    %c0 = arith.constant 0 : index
    %c0_0 = arith.constant 0 : index
    %0 = vector.load %arg2[%c0, %c0_0] : memref<16x32xf32, #tpu.memory_space<vmem>>, vector<16x32xf32>
    %c0_1 = arith.constant 0 : index
    %c0_2 = arith.constant 0 : index
    %1 = vector.load %arg3[%c0_1, %c0_2] : memref<1x32xf32, #tpu.memory_space<vmem>>, vector<1x32xf32>
    %c0_3 = arith.constant 0 : index
    %c0_4 = arith.constant 0 : index
    %2 = vector.load %arg4[%c0_3, %c0_4] : memref<1x32xf32, #tpu.memory_space<vmem>>, vector<1x32xf32>
    %cst = arith.constant dense<0.000000e+00> : vector<16xf32>
    %3 = vector.multi_reduction <add>, %0, %cst [1] : vector<16x32xf32> to vector<16xf32>
    %4 = vector.shape_cast %3 : vector<16xf32> to vector<16x1xf32>
    %cst_5 = arith.constant 3.200000e+01 : f32
    %5 = vector.broadcast %cst_5 : f32 to vector<16x1xf32>
    %6 = arith.divf %4, %5 : vector<16x1xf32>
    %7 = vector.broadcast %6 : vector<16x1xf32> to vector<16x32xf32>
    %8 = arith.subf %0, %7 : vector<16x32xf32>
    %9 = arith.mulf %8, %8 : vector<16x32xf32>
    %cst_6 = arith.constant dense<0.000000e+00> : vector<16xf32>
    %10 = vector.multi_reduction <add>, %9, %cst_6 [1] : vector<16x32xf32> to vector<16xf32>
    %11 = vector.shape_cast %10 : vector<16xf32> to vector<16x1xf32>
    %cst_7 = arith.constant 0.0322580636 : f32
    %12 = vector.broadcast %cst_7 : f32 to vector<16x1xf32>
    %13 = arith.mulf %11, %12 : vector<16x1xf32>
    %14 = math.sqrt %13 : vector<16x1xf32>
    %cst_8 = arith.constant 9.99999997E-7 : f32
    %15 = vector.broadcast %cst_8 : f32 to vector<16x1xf32>
    %16 = arith.addf %14, %15 : vector<16x1xf32>
    %cst_9 = arith.constant 1.000000e+00 : f32
    %17 = vector.broadcast %cst_9 : f32 to vector<16x1xf32>
    %18 = arith.divf %17, %16 : vector<16x1xf32>
    %19 = vector.broadcast %18 : vector<16x1xf32> to vector<16x32xf32>
    %20 = arith.mulf %8, %19 : vector<16x32xf32>
    %21 = vector.broadcast %1 : vector<1x32xf32> to vector<16x32xf32>
    %22 = arith.mulf %21, %20 : vector<16x32xf32>
    %23 = vector.broadcast %2 : vector<1x32xf32> to vector<16x32xf32>
    %24 = arith.addf %22, %23 : vector<16x32xf32>
    %c0_10 = arith.constant 0 : index
    %c0_11 = arith.constant 0 : index
    %25 = vector.load %arg5[%c0_10, %c0_11] : memref<32x32xf32, #tpu.memory_space<vmem>>, vector<32x32xf32>
    %cst_12 = arith.constant dense<0.000000e+00> : vector<16x32xf32>
    %26 = tpu.matmul %24, %25, %cst_12 {dimension_numbers = #tpu.dot_dimension_numbers<[1], [0], [0], [1], [0, 0, 1, 1], [], []>} : vector<16x32xf32>, vector<32x32xf32>, vector<16x32xf32> -> vector<16x32xf32>
    %c0_13 = arith.constant 0 : index
    %c0_14 = arith.constant 0 : index
    %27 = vector.load %arg6[%c0_13, %c0_14] : memref<1x32xf32, #tpu.memory_space<vmem>>, vector<1x32xf32>
    %28 = vector.broadcast %27 : vector<1x32xf32> to vector<16x32xf32>
    %29 = arith.addf %26, %28 : vector<16x32xf32>
    %30 = arith.addf %0, %29 : vector<16x32xf32>
    %c0_15 = arith.constant 0 : index
    %c0_16 = arith.constant 0 : index
    %31 = vector.load %arg7[%c0_15, %c0_16] : memref<16x32xf32, #tpu.memory_space<vmem>>, vector<16x32xf32>
    tpu.vector_store %arg7[%c0_15, %c0_16], %30 {strides = array<i32>} : memref<16x32xf32, #tpu.memory_space<vmem>>, vector<16x32xf32>,
    return
  }
  func.func @transform_0(%arg0: i32) -> i32 {
    %c0_i32 = arith.constant 0 : i32
    %c0_i32_0 = arith.constant 0 : i32
    return %c0_i32 : i32
  }
  func.func @transform_1(%arg0: i32) -> (i32, i32) {
    %c0_i32 = arith.constant 0 : i32
    %c0_i32_0 = arith.constant 0 : i32
    return %arg0, %c0_i32 : i32, i32
  }
  func.func @transform_2(%arg0: i32) -> (i32, i32) {
    %c0_i32 = arith.constant 0 : i32
    %c0_i32_0 = arith.constant 0 : i32
    %c0_i32_1 = arith.constant 0 : i32
    return %c0_i32, %c0_i32_0 : i32, i32
  }
  func.func @transform_3(%arg0: i32) -> (i32, i32) {
    %c0_i32 = arith.constant 0 : i32
    %c0_i32_0 = arith.constant 0 : i32
    %c0_i32_1 = arith.constant 0 : i32
    return %c0_i32, %c0_i32_0 : i32, i32
  }
  func.func @transform_4(%arg0: i32) -> (i32, i32) {
    %c0_i32 = arith.constant 0 : i32
    %c0_i32_0 = arith.constant 0 : i32
    %c0_i32_1 = arith.constant 0 : i32
    return %c0_i32, %c0_i32_0 : i32, i32
  }
  func.func @transform_5(%arg0: i32) -> (i32, i32) {
    %c0_i32 = arith.constant 0 : i32
    %c0_i32_0 = arith.constant 0 : i32
    %c0_i32_1 = arith.constant 0 : i32
    return %c0_i32, %c0_i32_0 : i32, i32
  }
  func.func @transform_6(%arg0: i32) -> (i32, i32) {
    %c0_i32 = arith.constant 0 : i32
    %c0_i32_0 = arith.constant 0 : i32
    return %arg0, %c0_i32 : i32, i32
  }
}

</mosaic_0001>

<llo_original>
// kernel: tpu_custom_call.1
$region0: #{tpu_custom_call.1}
  #allocation0 [shape = 'u32[]', space=smem, size = 0x4, offset = 0x4, fixed_abs, tag = 'smem constant byte address 0x4 - core index']
  #allocation1 [shape = 'u32[144,128]{1,0:T(1,128)}', space=vmem, size = 0x12000, scoped, tag = 'internal scratch']
  #allocation2 [shape = 's32[1]{0:T(128)S(6)}', space=smem, size = 0x200, scoped, tag = 'scoped memory for tpu_custom_call.1']
  %s0 = inlined_call_operand.<no memory space> [shape: s32[1], index: 0, kind: input, shape index: {}]
  %s1 = inlined_call_operand.hbm [shape: f32[16,32], index: 1, kind: input, shape index: {}]
  %s2 = inlined_call_operand.vmem [shape: f32[1,32], index: 2, kind: input, shape index: {}]
  %s3 = inlined_call_operand.vmem [shape: f32[1,32], index: 3, kind: input, shape index: {}]
  %s4 = inlined_call_operand.hbm [shape: f32[32,32], index: 4, kind: input, shape index: {}]
  %s5 = inlined_call_operand.vmem [shape: f32[1,32], index: 5, kind: input, shape index: {}]
  %s6 = inlined_call_operand.hbm [shape: f32[16,32], index: 6, kind: output, shape index: {}]
  %s7 = sld [smem:[#allocation0]]
  $region42: #{tpu_custom_call.1} parent=0
    _
  %s9 = ssub.s32 1, %s7
  %s10 = scalar_select 0, %s9, %s7
  %11 = sst [smem:[#allocation2]] %s0
  $region1: #{tpu_custom_call.1} parent=0
    #allocation3 [shape = 'u8[8192]{0}', space=vmem, size = 0x2000, scoped, tag = 'input window, operand 1, single buffered']
    #allocation4 [shape = 's32[1]{0}', space=sflag, size = 0x4, scoped, tag = 'scoped memory for tpu_custom_call.1']
    #allocation5 [shape = 's32[1]{0}', space=sflag, size = 0x4, scoped, tag = 'scoped memory for tpu_custom_call.1']
    #allocation6 [shape = 'u8[16384]{0}', space=vmem, size = 0x4000, scoped, tag = 'input window, operand 4, single buffered']
    #allocation7 [shape = 's32[1]{0}', space=sflag, size = 0x4, scoped, tag = 'scoped memory for tpu_custom_call.1']
    #allocation8 [shape = 'u8[8192]{0}', space=vmem, size = 0x2000, scoped, tag = 'output window, operand 0, single buffered']
    %12 = vsyncpa [#allocation4], 0
    %13 = vsyncpa [#allocation7], 0
    %14 = vsyncpa [#allocation5], 0
    // Predicated region
    $region2: #{tpu_custom_call.1} parent=1 // pred_check
      _
    $region3: #{tpu_custom_call.1} parent=1 // pred_check_branch
      %16 = sbr.rel (0) target = $region5
    $region4: #{tpu_custom_call.1} parent=1 // pred_region
      _
    $region5: #{tpu_custom_call.1} parent=1 // pred_fallthru
      _
    // Predicated region
    $region6: #{tpu_custom_call.1} parent=1 // pred_check
      _
    $region7: #{tpu_custom_call.1} parent=1 // pred_check_branch
      %18 = sbr.rel (0) target = $region9
    $region8: #{tpu_custom_call.1} parent=1 // pred_region
      %s20 = ssub.s32 256, 256
      %21 = vsyncadd [#allocation4], %s20
      %s22 = sshll.u32 [#allocation3], 4
      %s23 = int_to_ptr.vmem [resolvable:$true] %s22
      %28 = dma.hbm_to_vmem [thread:$0]  %s1, 256, %s23, [#allocation4], 128, 128, 8
    $region9: #{tpu_custom_call.1} parent=1 // pred_fallthru
      _
    // Predicated region
    $region10: #{tpu_custom_call.1} parent=1 // pred_check
      _
    $region11: #{tpu_custom_call.1} parent=1 // pred_check_branch
      %30 = sbr.rel (0) target = $region13
    $region12: #{tpu_custom_call.1} parent=1 // pred_region
      _
    $region13: #{tpu_custom_call.1} parent=1 // pred_fallthru
      _
    // Predicated region
    $region14: #{tpu_custom_call.1} parent=1 // pred_check
      _
    $region15: #{tpu_custom_call.1} parent=1 // pred_check_branch
      %32 = sbr.rel (0) target = $region17
    $region16: #{tpu_custom_call.1} parent=1 // pred_region
      _
    $region17: #{tpu_custom_call.1} parent=1 // pred_fallthru
      _
    // Predicated region
    $region18: #{tpu_custom_call.1} parent=1 // pred_check
      _
    $region19: #{tpu_custom_call.1} parent=1 // pred_check_branch
      %34 = sbr.rel (0) target = $region21
    $region20: #{tpu_custom_call.1} parent=1 // pred_region
      %s36 = ssub.s32 512, 512
      %37 = vsyncadd [#allocation7], %s36
      %s38 = sshll.u32 [#allocation6], 4
      %s39 = int_to_ptr.vmem [resolvable:$true] %s38
      %44 = dma.hbm_to_vmem [thread:$0]  %s4, 512, %s39, [#allocation7], 128, 128, 8
    $region21: #{tpu_custom_call.1} parent=1 // pred_fallthru
      _
    // Predicated region
    $region22: #{tpu_custom_call.1} parent=1 // pred_check
      _
    $region23: #{tpu_custom_call.1} parent=1 // pred_check_branch
      %46 = sbr.rel (0) target = $region25
    $region24: #{tpu_custom_call.1} parent=1 // pred_region
      _
    $region25: #{tpu_custom_call.1} parent=1 // pred_fallthru
      _
    // Predicated region
    $region26: #{tpu_custom_call.1} parent=1 // pred_check
      _
    $region27: #{tpu_custom_call.1} parent=1 // pred_check_branch
      %48 = sbr.rel (0) target = $region29
    $region28: #{tpu_custom_call.1} parent=1 // pred_region
      %49 = dma.done [#allocation4], 256
    $region29: #{tpu_custom_call.1} parent=1 // pred_fallthru
      _
    // Predicated region
    $region30: #{tpu_custom_call.1} parent=1 // pred_check
      _
    $region31: #{tpu_custom_call.1} parent=1 // pred_check_branch
      %51 = sbr.rel (0) target = $region33
    $region32: #{tpu_custom_call.1} parent=1 // pred_region
      %52 = dma.done [#allocation7], 512
    $region33: #{tpu_custom_call.1} parent=1 // pred_fallthru
      _
    %v53 = vld [vmem:[#allocation3] sm:$0xff]
    %v54 = vld [vmem:[#allocation3 + $0x8] sm:$0xff]
    %v55 = vld [vmem:[%s2] sm:$0x1]
    %v56 = vld [vmem:[%s3] sm:$0x1]
    %vm57 = vcmask 261120
    %v58 = vsel %vm57, %v53, 0.0
    %59 = vadd.xlane.f32.xlu0 %v58
    %v60 = vpop.xlane.xlu0 %59
    %v61 = vsel %vm57, %v54, 0.0
    %62 = vadd.xlane.f32.xlu0 %v61
    %v63 = vpop.xlane.xlu0 %62
    %v64 = vrcp.pop 32.0
    %v65 = vmul.f32 %v60, %v64
    %v66 = vmul.f32 %v63, %v64
    %v67 = vsub.f32 %v53, %v65
    %v68 = vsub.f32 %v54, %v66
    %v69 = vmul.f32 %v67, %v67
    %v70 = vmul.f32 %v68, %v68
    %v71 = vsel %vm57, %v69, 0.0
    %72 = vadd.xlane.f32.xlu0 %v71
    %v73 = vpop.xlane.xlu0 %72
    %v74 = vsel %vm57, %v70, 0.0
    %75 = vadd.xlane.f32.xlu0 %v74
    %v76 = vpop.xlane.xlu0 %75
    %v77 = vmul.f32 %v73, 0.032258064
    %v78 = vmul.f32 %v76, 0.032258064
    %v79 = vrsqrt.pop %v77
    %v80 = vmul.f32 %v77, %v79
    %vm81 = vcmp.eq.f32.partialorder %v77, inf
    %v82 = vsel %vm81, %v77, %v80
    %vm83 = vcmp.eq.f32.partialorder %v77, 0.0
    %v84 = vand.u32 %v77, 2147483648
    %v85 = vsel %vm83, %v84, %v82
    %v86 = vrsqrt.pop %v78
    %v87 = vmul.f32 %v78, %v86
    %vm88 = vcmp.eq.f32.partialorder %v78, inf
    %v89 = vsel %vm88, %v78, %v87
    %vm90 = vcmp.eq.f32.partialorder %v78, 0.0
    %v91 = vand.u32 %v78, 2147483648
    %v92 = vsel %vm90, %v91, %v89
    %v93 = vadd.f32 %v85, 1e-06
    %v94 = vadd.f32 %v92, 1e-06
    %v95 = vrcp.pop %v93
    %v96 = vmul.f32 1.0, %v95
    %v97 = vrcp.pop %v94
    %v98 = vmul.f32 1.0, %v97
    %v99 = vmul.f32 %v67, %v96
    %v100 = vmul.f32 %v68, %v98
    %v102 = vlaneseq
    %v103 = vshrl.u32 %v102, 7
    %v104 = vsub.s32 0, %v103
    %v105 = vrot.slane %v55, %v104
    %v107 = vmul.f32 %v105, %v99
    %v108 = vmul.f32 %v105, %v100
    %v110 = vlaneseq
    %v111 = vshrl.u32 %v110, 7
    %v112 = vsub.s32 0, %v111
    %v113 = vrot.slane %v56, %v112
    %v115 = vadd.f32 %v107, %v113
    %v116 = vadd.f32 %v108, %v113
    %v117 = vld [vmem:[#allocation6] sm:$0xff]
    %v118 = vld [vmem:[#allocation6 + $0x8] sm:$0xff]
    %v119 = vld [vmem:[#allocation6 + $0x10] sm:$0xff]
    %v120 = vld [vmem:[#allocation6 + $0x18] sm:$0xff]
    %v121 = vld [vmem:[%s5] sm:$0x1]
    %v123 = vlaneseq
    %v124 = vshrl.u32 %v123, 7
    %v125 = vsub.s32 0, %v124
    %v126 = vrot.slane %v121, %v125
    %v129 = vsel %vm57, %v115, 0
    %v132 = vsel %vm57, %v116, 0
    %134 = vmatprep.subr.mxu0 0.0
    %135 = vmatpush1.msra.mxu0 %v117
    %136 = vmatprep.subr.mxu0 0.0
    %137 = vmatpush1.msra.mxu0 %v118
    %138 = vmatprep.subr.mxu0 0.0
    %139 = vmatpush1.msra.mxu0 %v119
    %140 = vmatprep.subr.mxu0 0.0
    %141 = vmatpush1.msra.mxu0 %v120
    %142 = vmatprep.subr.mxu0 0.0
    %143 = vmatpush1.msra.mxu0 0.0
    %144 = vmatprep.subr.mxu0 0.0
    %145 = vmatpush1.msra.mxu0 0.0
    %146 = vmatprep.subr.mxu0 0.0
    %147 = vmatpush1.msra.mxu0 0.0
    %148 = vmatprep.subr.mxu0 0.0
    %149 = vmatpush1.msra.mxu0 0.0
    %150 = vmatprep.subr.mxu0 0.0
    %151 = vmatpush1.msra.mxu0 0.0
    %152 = vmatprep.subr.mxu0 0.0
    %153 = vmatpush1.msra.mxu0 0.0
    %154 = vmatprep.subr.mxu0 0.0
    %155 = vmatpush1.msra.mxu0 0.0
    %156 = vmatprep.subr.mxu0 0.0
    %157 = vmatpush1.msra.mxu0 0.0
    %158 = vmatprep.subr.mxu0 0.0
    %159 = vmatpush1.msra.mxu0 0.0
    %160 = vmatprep.subr.mxu0 0.0
    %161 = vmatpush1.msra.mxu0 0.0
    %162 = vmatprep.subr.mxu0 0.0
    %163 = vmatpush1.msra.mxu0 0.0
    %164 = vmatprep.subr.mxu0 0.0
    %165 = vmatpush1.msra.mxu0 0.0
    %166 = vmatprep.subr.mxu0 0.0
    %167 = vmatpush1.msra.mxu0 0.0
    %168 = vmatprep.subr.mxu0 0.0
    %169 = vmatpush1.msra.mxu0 0.0
    %170 = vmatprep.subr.mxu0 0.0
    %171 = vmatpush1.msra.mxu0 0.0
    %172 = vmatprep.subr.mxu0 0.0
    %173 = vmatpush1.msra.mxu0 0.0
    %174 = vmatprep.subr.mxu0 0.0
    %175 = vmatpush1.msra.mxu0 0.0
    %176 = vmatprep.subr.mxu0 0.0
    %177 = vmatpush1.msra.mxu0 0.0
    %178 = vmatprep.subr.mxu0 0.0
    %179 = vmatpush1.msra.mxu0 0.0
    %180 = vmatprep.subr.mxu0 0.0
    %181 = vmatpush1.msra.mxu0 0.0
    %182 = vmatprep.subr.mxu0 0.0
    %183 = vmatpush1.msra.mxu0 0.0
    %184 = vmatprep.subr.mxu0 0.0
    %185 = vmatpush1.msra.mxu0 0.0
    %186 = vmatprep.subr.mxu0 0.0
    %187 = vmatpush1.msra.mxu0 0.0
    %188 = vmatprep.subr.mxu0 0.0
    %189 = vmatpush1.msra.mxu0 0.0
    %190 = vmatprep.subr.mxu0 0.0
    %191 = vmatpush1.msra.mxu0 0.0
    %192 = vmatprep.subr.mxu0 0.0
    %193 = vmatpush1.msra.mxu0 0.0
    %194 = vmatprep.subr.mxu0 0.0
    %195 = vmatpush1.msra.mxu0 0.0
    %196 = vmatprep.subr.mxu0 0.0
    %197 = vmatpush1.msra.mxu0 0.0
    %198 = vmatprep.mubr.f32.mxu0 0.0
    %199 = vmatmul.mubr.f32.gmra.mrb[0].mxu0 %v129
    %v200 = vpop.f32.mrb[0].mxu0
    %v201 = vadd.f32 %v126, %v200
    %v202 = vpop.f32.mrb[0].mxu0
    %203 = vmatprep.mubr.f32.mxu0 0.0
    %204 = vmatmul.mubr.f32.gmra.mrb[0].mxu0 %v132
    %v205 = vpop.f32.mrb[0].mxu0
    %v206 = vadd.f32 %v126, %v205
    %v207 = vpop.f32.mrb[0].mxu0
    %208 = vdwg.mxu0
    %v209 = vadd.f32 %v53, %v201
    %v210 = vadd.f32 %v54, %v206
    %211 = vst.msk [vmem:[#allocation8] sm:$0xff] %vm57, %v209
    %212 = vst.msk [vmem:[#allocation8 + $0x8] sm:$0xff] %vm57, %v210
    // Predicated region
    $region34: #{tpu_custom_call.1} parent=1 // pred_check
      _
    $region35: #{tpu_custom_call.1} parent=1 // pred_check_branch
      %214 = sbr.rel (0) target = $region37
    $region36: #{tpu_custom_call.1} parent=1 // pred_region
      %s216 = ssub.s32 256, 256
      %217 = vsyncadd [#allocation5], %s216
      %s218 = sshll.u32 [#allocation8], 4
      %s219 = int_to_ptr.vmem [resolvable:$true] %s218
      %224 = dma.vmem_to_hbm [thread:$0]  %s219, 256, %s6, [#allocation5], 128, 128, 8
    $region37: #{tpu_custom_call.1} parent=1 // pred_fallthru
      _
    // Predicated region
    $region38: #{tpu_custom_call.1} parent=1 // pred_check
      _
    $region39: #{tpu_custom_call.1} parent=1 // pred_check_branch
      %226 = sbr.rel (0) target = $region41
    $region40: #{tpu_custom_call.1} parent=1 // pred_region
      %227 = dma.done [#allocation5], 256
    $region41: #{tpu_custom_call.1} parent=1 // pred_fallthru
      _
    %228 = vsyncpa [#allocation4], 1
    %229 = vsyncpa [#allocation7], 1
    %230 = vsyncpa [#allocation5], 1

</llo_original>
